<compile_context>
chip_gen: v6e
topology: v6e:2x2x1
jax: 0.10.0
libtpu: 0.0.40
codegen_flags: <defaults>
</compile_context>

<pallas_src>
import math

import jax
import jax.numpy as jnp
from jax.experimental import pallas as pl
from jax.experimental.pallas import tpu as pltpu


_GELU_C = math.sqrt(2.0 / math.pi)


def _gelu_new(h):
    # GPT-2 / HF "gelu_new"; u = h + 0.044715*h^3 written with one fewer multiply.
    u = h * (1.0 + 0.044715 * (h * h))
    return 0.5 * h * (1.0 + jnp.tanh(_GELU_C * u))


def _round_up(x, m):
    return ((x + m - 1) // m) * m


def _vmem_capacity_bytes():
    """Per-core VMEM capacity; conservative 64 MiB (v7x per-TC) fallback."""
    try:
        cap = int(getattr(pltpu.get_tpu_info(), "vmem_capacity_bytes", 0))
        if cap > 0:
            return min(cap, 128 * 1024 * 1024)
    except Exception:
        pass
    return 64 * 1024 * 1024


# ----------------------------------------------------------------------------
# Kernels
# ----------------------------------------------------------------------------
def mlp_resident_kernel(x_ref, w_in_ref, b_in_ref, w_out_ref, b_out_ref, o_ref):
    # Weights fully resident in VMEM; grid = (row_tiles,). No reduction axis.
    x = x_ref[...].astype(w_in_ref.dtype)                       # MXU-native dtype
    h = jnp.dot(x, w_in_ref[...], preferred_element_type=jnp.float32)
    h = h + b_in_ref[...]                                       # f32 bias
    a = _gelu_new(h)                                            # f32 VPU + EUP
    out = jnp.dot(a.astype(w_out_ref.dtype), w_out_ref[...],
                  preferred_element_type=jnp.float32)
    o_ref[...] = (out + b_out_ref[...]).astype(o_ref.dtype)


def mlp_streaming_kernel(x_ref, w_in_ref, b_in_ref, w_out_ref, b_out_ref,
                         o_ref, acc_ref):
    # Grid: (row_tile i, d_mlp_chunk k); k is the reduction axis (last).
    k = pl.program_id(1)

    @pl.when(k == 0)
    def _():
        # Fold b_out into the accumulator init (saves a (tm, D) add per tile).
        acc_ref[...] = jnp.broadcast_to(b_out_ref[...], acc_ref.shape)

    x = x_ref[...].astype(w_in_ref.dtype)                       # MXU-native dtype
    h = jnp.dot(x, w_in_ref[...], preferred_element_type=jnp.float32)
    h = h + b_in_ref[...]
    a = _gelu_new(h)
    acc_ref[...] += jnp.dot(a.astype(w_out_ref.dtype), w_out_ref[...],
                            preferred_element_type=jnp.float32)

    @pl.when(k == pl.num_programs(1) - 1)
    def _():
        o_ref[...] = acc_ref[...].astype(o_ref.dtype)


# ----------------------------------------------------------------------------
# Wrapper
# ----------------------------------------------------------------------------
def mlp_forward(x, w_in, b_in, w_out, b_out, *,
                tm=None, tk=None, use_bf16_matmul=None, force_variant=None):
    """x: [batch, posn, d_model] -> [batch, posn, d_model]."""
    batch, posn, d_model = x.shape
    d_mlp = w_in.shape[1]
    M = batch * posn

    # ---- MXU compute dtype --------------------------------------------------
    if use_bf16_matmul is None:
        use_bf16_matmul = (x.dtype == jnp.float32)
    w_dtype = jnp.bfloat16 if use_bf16_matmul else w_in.dtype
    w_in_c = w_in.astype(w_dtype)          # cast once in the wrapper:
    w_out_c = w_out.astype(w_dtype)        # halves weight HBM traffic & VMEM
    b_in_f32 = b_in.astype(jnp.float32).reshape(1, d_mlp)
    b_out_f32 = b_out.astype(jnp.float32).reshape(1, d_model)

    x_isz = x.dtype.itemsize
    o_isz = x.dtype.itemsize
    w_isz = jnp.dtype(w_dtype).itemsize

    # ---- lane-dense padded feature dims -------------------------------------
    D = _round_up(d_model, 128)
    F = _round_up(d_mlp, 128)

    # ---- VMEM budget ---------------------------------------------------------
    vmem_cap = _vmem_capacity_bytes()
    budget = int(vmem_cap * 0.85)
    headroom = 4 << 20      # compiler-internal temps (f32 h, gelu, bf16 cast)

    # ---- row tile ------------------------------------------------------------
    M8 = _round_up(max(M, 1), 8)
    if tm is None:
        tm = 512 if M8 >= 1024 else (256 if M8 >= 256 else M8)
    tm = max(8, min(_round_up(tm, 8), M8))
    # >= 2 row tiles whenever possible so the "parallel" row axis can shard
    # across both v7x TensorCores (negligible cost on single-TC chips).
    if M8 > 8 and _round_up(M8, tm) // tm < 2:
        tm = max(8, _round_up((M8 + 1) // 2, 8))

    # ---- variant selection: weights-resident vs. streamed d_mlp chunks -------
    def resident_need(tm_):
        return (2 * tm_ * D * (x_isz + o_isz)      # x / out tiles (double-buffered)
                + 2 * 2 * D * F * w_isz            # W_in + W_out (conservative 2x)
                + 2 * (F + D) * 4                  # biases
                + 3 * tm_ * F * 4                  # in-kernel h / gelu / cast temps
                + headroom)

    tm_res = tm
    need_res = resident_need(tm_res)
    while need_res > budget and tm_res > 64:
        tm_res = max(64, _round_up(tm_res // 2, 8))
        need_res = resident_need(tm_res)

    if force_variant == "streaming":
        use_resident = False
    elif force_variant == "resident":
        use_resident = True
    else:
        use_resident = need_res <= budget

    if use_resident:
        tm_eff = tm_res
        F_pad = F
        need = need_res
    else:
        tk_s = 1024 if tk is None else tk
        tk_s = max(128, min(_round_up(tk_s, 128), F))

        def streaming_need(tm_, tk_):
            return (2 * tm_ * D * (x_isz + o_isz)
                    + 2 * 2 * D * tk_ * w_isz      # W_in / W_out chunks (dbl-buf)
                    + 2 * (tk_ + D) * 4            # bias chunks
                    + tm_ * D * 4                  # f32 accumulator scratch
                    + 3 * tm_ * tk_ * 4            # in-kernel temps
                    + headroom)

        tm_s = tm
        while streaming_need(tm_s, tk_s) > budget and tk_s > 256:
            tk_s = max(256, _round_up(tk_s // 2, 128))
        while streaming_need(tm_s, tk_s) > budget and tm_s > 64:
            tm_s = max(64, _round_up(tm_s // 2, 8))

        tm_eff = tm_s
        F_pad = _round_up(F, tk_s)
        need = streaming_need(tm_s, tk_s)

    M_pad = _round_up(M8, tm_eff)
    vmem_limit = int(min(max(need, 32 * 1024 * 1024), int(vmem_cap * 0.95)))

    # ---- zero-pad operands (exact: padded rows/cols contribute 0) ------------
    x2d = x.reshape(M, d_model)
    if (M_pad, D) != (M, d_model):
        x2d = jnp.pad(x2d, ((0, M_pad - M), (0, D - d_model)))
    w_in_p = w_in_c
    if (D, F_pad) != (d_model, d_mlp):
        w_in_p = jnp.pad(w_in_c, ((0, D - d_model), (0, F_pad - d_mlp)))
    w_out_p = w_out_c
    if (F_pad, D) != (d_mlp, d_model):
        w_out_p = jnp.pad(w_out_c, ((0, F_pad - d_mlp), (0, D - d_model)))
    b_in_p = b_in_f32
    if F_pad != d_mlp:
        b_in_p = jnp.pad(b_in_f32, ((0, 0), (0, F_pad - d_mlp)))
    b_out_p = b_out_f32
    if D != d_model:
        b_out_p = jnp.pad(b_out_f32, ((0, 0), (0, D - d_model)))

    # ---- advisory cost estimate ----------------------------------------------
    n_row_tiles = M_pad // tm_eff
    weight_bytes = 2 * D * F_pad * w_isz
    cost = pl.CostEstimate(
        flops=2 * 2 * M * d_model * d_mlp,                 # two matmuls
        transcendentals=M * d_mlp,                         # tanh in gelu_new
        bytes_accessed=int(
            M_pad * D * (x_isz + o_isz)
            + (weight_bytes if use_resident else n_row_tiles * weight_bytes)
            + (F_pad + D) * 4),
    )

    if use_resident:
        out2d = pl.pallas_call(
            mlp_resident_kernel,
            out_shape=jax.ShapeDtypeStruct((M_pad, D), x.dtype),
            grid_spec=pltpu.PrefetchScalarGridSpec(
                num_scalar_prefetch=0,
                grid=(n_row_tiles,),
                in_specs=[
                    pl.BlockSpec((tm_eff, D), lambda i: (i, 0)),   # x rows
                    pl.BlockSpec((D, F_pad), lambda i: (0, 0)),    # W_in (resident)
                    pl.BlockSpec((1, F_pad), lambda i: (0, 0)),    # b_in
                    pl.BlockSpec((F_pad, D), lambda i: (0, 0)),    # W_out (resident)
                    pl.BlockSpec((1, D), lambda i: (0, 0)),        # b_out
                ],
                out_specs=pl.BlockSpec((tm_eff, D), lambda i: (i, 0)),
            ),
            compiler_params=pltpu.CompilerParams(
                dimension_semantics=("parallel",),
                vmem_limit_bytes=vmem_limit,
            ),
            cost_estimate=cost,
        )(x2d, w_in_p, b_in_p, w_out_p, b_out_p)
    else:
        out2d = pl.pallas_call(
            mlp_streaming_kernel,
            out_shape=jax.ShapeDtypeStruct((M_pad, D), x.dtype),
            grid_spec=pltpu.PrefetchScalarGridSpec(
                num_scalar_prefetch=0,
                grid=(n_row_tiles, F_pad // tk_s),
                in_specs=[
                    pl.BlockSpec((tm_eff, D), lambda i, k: (i, 0)),  # x rows
                    pl.BlockSpec((D, tk_s), lambda i, k: (0, k)),    # W_in chunk
                    pl.BlockSpec((1, tk_s), lambda i, k: (0, k)),    # b_in chunk
                    pl.BlockSpec((tk_s, D), lambda i, k: (k, 0)),    # W_out chunk
                    pl.BlockSpec((1, D), lambda i, k: (0, 0)),       # b_out
                ],
                out_specs=pl.BlockSpec((tm_eff, D), lambda i, k: (i, 0)),
                scratch_shapes=[pltpu.VMEM((tm_eff, D), jnp.float32)],
            ),
            compiler_params=pltpu.CompilerParams(
                dimension_semantics=("parallel", "arbitrary"),
                vmem_limit_bytes=vmem_limit,
            ),
            cost_estimate=cost,
        )(x2d, w_in_p, b_in_p, w_out_p, b_out_p)

    return out2d[:M, :d_model].reshape(batch, posn, d_model)


def mlp_reference(x, w_in, b_in, w_out, b_out):
    h = jnp.einsum("bpd,dm->bpm", x, w_in) + b_in
    a = _gelu_new(h)
    return jnp.einsum("bpm,md->bpd", a, w_out) + b_out


if __name__ == "__main__":
    # Small config consistent with the module (d_mlp = 4 * d_model, std=0.02).
    batch, posn, d_model, d_mlp = 2, 8, 128, 512
    init_range = 0.02

    key = jax.random.PRNGKey(0)
    k_x, k_win, k_wout, k_bin, k_bout = jax.random.split(key, 5)

    x = jax.random.normal(k_x, (batch, posn, d_model), dtype=jnp.float32)
    w_in = init_range * jax.random.normal(k_win, (d_model, d_mlp), dtype=jnp.float32)
    w_out = init_range * jax.random.normal(k_wout, (d_mlp, d_model), dtype=jnp.float32)
    # Biases are zero-init in the module; small random values exercise the
    # bias-add and the b_out-folded-into-accumulator paths.
    b_in = 0.01 * jax.random.normal(k_bin, (d_mlp,), dtype=jnp.float32)
    b_out = 0.01 * jax.random.normal(k_bout, (d_model,), dtype=jnp.float32)

    ref = mlp_reference(x, w_in, b_in, w_out, b_out)

    # Primary path (auto-selects the weights-resident variant at this size).
    out = jax.block_until_ready(mlp_forward(x, w_in, b_in, w_out, b_out))
    assert out.shape == (batch, posn, d_model)
    # bf16 MXU operands with f32 accumulation -> tolerance looser than pure f32.
    assert jnp.allclose(out, ref, atol=2e-2, rtol=2e-2), "resident variant mismatch"

    # Also exercise the streaming (d_mlp-chunked) fallback path.
    out_s = jax.block_until_ready(
        mlp_forward(x, w_in, b_in, w_out, b_out, force_variant="streaming"))
    assert jnp.allclose(out_s, ref, atol=2e-2, rtol=2e-2), "streaming variant mismatch"

    print("KERNEL_OK")
</pallas_src>

<mosaic_0001>
module attributes {stable_mosaic.version = 11 : i64} {
  func.func @mlp_resident_kernel(%arg0: i32, %arg1: memref<8x128xf32, #tpu.memory_space<vmem>>, %arg2: memref<128x512xbf16, #tpu.memory_space<vmem>>, %arg3: memref<1x512xf32, #tpu.memory_space<vmem>>, %arg4: memref<512x128xbf16, #tpu.memory_space<vmem>>, %arg5: memref<1x128xf32, #tpu.memory_space<vmem>>, %arg6: memref<8x128xf32, #tpu.memory_space<vmem>>) attributes {dimension_semantics = [#tpu.dimension_semantics<parallel>], iteration_bounds = array<i64: 2>, scalar_prefetch = 0 : i64, scratch_operands = 0 : i64, tpu.core_type = #tpu.core_type<tc>, window_params = [{transform_indices = @transform_0, window_bounds = array<i64: 8, 128>}, {pipeline_mode = #tpu.pipeline_mode<synchronous>, transform_indices = @transform_1, window_bounds = array<i64: 128, 512>}, {pipeline_mode = #tpu.pipeline_mode<synchronous>, transform_indices = @transform_2, window_bounds = array<i64: 1, 512>}, {pipeline_mode = #tpu.pipeline_mode<synchronous>, transform_indices = @transform_3, window_bounds = array<i64: 512, 128>}, {pipeline_mode = #tpu.pipeline_mode<synchronous>, transform_indices = @transform_4, window_bounds = array<i64: 1, 128>}, {transform_indices = @transform_5, window_bounds = array<i64: 8, 128>}]} {
    %c0 = arith.constant 0 : index
    %c0_0 = arith.constant 0 : index
    %0 = vector.load %arg1[%c0, %c0_0] : memref<8x128xf32, #tpu.memory_space<vmem>>, vector<8x128xf32>
    %1 = arith.truncf %0 : vector<8x128xf32> to vector<8x128xbf16>
    %c0_1 = arith.constant 0 : index
    %c0_2 = arith.constant 0 : index
    %2 = vector.load %arg2[%c0_1, %c0_2] : memref<128x512xbf16, #tpu.memory_space<vmem>>, vector<128x512xbf16>
    %cst = arith.constant dense<0.000000e+00> : vector<8x512xf32>
    %3 = tpu.matmul %1, %2, %cst {dimension_numbers = #tpu.dot_dimension_numbers<[1], [0], [0], [1], [0, 0, 1, 1], [], []>} : vector<8x128xbf16>, vector<128x512xbf16>, vector<8x512xf32> -> vector<8x512xf32>
    %c0_3 = arith.constant 0 : index
    %c0_4 = arith.constant 0 : index
    %4 = vector.load %arg3[%c0_3, %c0_4] : memref<1x512xf32, #tpu.memory_space<vmem>>, vector<1x512xf32>
    %5 = vector.broadcast %4 : vector<1x512xf32> to vector<8x512xf32>
    %6 = arith.addf %3, %5 : vector<8x512xf32>
    %7 = arith.mulf %6, %6 : vector<8x512xf32>
    %cst_5 = arith.constant 4.471500e-02 : f32
    %8 = vector.broadcast %cst_5 : f32 to vector<8x512xf32>
    %9 = arith.mulf %8, %7 : vector<8x512xf32>
    %cst_6 = arith.constant 1.000000e+00 : f32
    %10 = vector.broadcast %cst_6 : f32 to vector<8x512xf32>
    %11 = arith.addf %10, %9 : vector<8x512xf32>
    %12 = arith.mulf %6, %11 : vector<8x512xf32>
    %cst_7 = arith.constant 5.000000e-01 : f32
    %13 = vector.broadcast %cst_7 : f32 to vector<8x512xf32>
    %14 = arith.mulf %13, %6 : vector<8x512xf32>
    %cst_8 = arith.constant 0.797884583 : f32
    %15 = vector.broadcast %cst_8 : f32 to vector<8x512xf32>
    %16 = arith.mulf %15, %12 : vector<8x512xf32>
    %17 = math.tanh %16 : vector<8x512xf32>
    %cst_9 = arith.constant 1.000000e+00 : f32
    %18 = vector.broadcast %cst_9 : f32 to vector<8x512xf32>
    %19 = arith.addf %18, %17 : vector<8x512xf32>
    %20 = arith.mulf %14, %19 : vector<8x512xf32>
    %21 = arith.truncf %20 : vector<8x512xf32> to vector<8x512xbf16>
    %c0_10 = arith.constant 0 : index
    %c0_11 = arith.constant 0 : index
    %22 = vector.load %arg4[%c0_10, %c0_11] : memref<512x128xbf16, #tpu.memory_space<vmem>>, vector<512x128xbf16>
    %cst_12 = arith.constant dense<0.000000e+00> : vector<8x128xf32>
    %23 = tpu.matmul %21, %22, %cst_12 {dimension_numbers = #tpu.dot_dimension_numbers<[1], [0], [0], [1], [0, 0, 1, 1], [], []>} : vector<8x512xbf16>, vector<512x128xbf16>, vector<8x128xf32> -> vector<8x128xf32>
    %c0_13 = arith.constant 0 : index
    %c0_14 = arith.constant 0 : index
    %24 = vector.load %arg5[%c0_13, %c0_14] : memref<1x128xf32, #tpu.memory_space<vmem>>, vector<1x128xf32>
    %25 = vector.broadcast %24 : vector<1x128xf32> to vector<8x128xf32>
    %26 = arith.addf %23, %25 : vector<8x128xf32>
    %c0_15 = arith.constant 0 : index
    %c0_16 = arith.constant 0 : index
    %27 = vector.load %arg6[%c0_15, %c0_16] : memref<8x128xf32, #tpu.memory_space<vmem>>, vector<8x128xf32>
    tpu.vector_store %arg6[%c0_15, %c0_16], %26 {strides = array<i32>} : memref<8x128xf32, #tpu.memory_space<vmem>>, vector<8x128xf32>,
    return
  }
  func.func @transform_0(%arg0: i32) -> (i32, i32) {
    %c0_i32 = arith.constant 0 : i32
    %c0_i32_0 = arith.constant 0 : i32
    return %arg0, %c0_i32 : i32, i32
  }
  func.func @transform_1(%arg0: i32) -> (i32, i32) {
    %c0_i32 = arith.constant 0 : i32
    %c0_i32_0 = arith.constant 0 : i32
    %c0_i32_1 = arith.constant 0 : i32
    return %c0_i32, %c0_i32_0 : i32, i32
  }
  func.func @transform_2(%arg0: i32) -> (i32, i32) {
    %c0_i32 = arith.constant 0 : i32
    %c0_i32_0 = arith.constant 0 : i32
    %c0_i32_1 = arith.constant 0 : i32
    return %c0_i32, %c0_i32_0 : i32, i32
  }
  func.func @transform_3(%arg0: i32) -> (i32, i32) {
    %c0_i32 = arith.constant 0 : i32
    %c0_i32_0 = arith.constant 0 : i32
    %c0_i32_1 = arith.constant 0 : i32
    return %c0_i32, %c0_i32_0 : i32, i32
  }
  func.func @transform_4(%arg0: i32) -> (i32, i32) {
    %c0_i32 = arith.constant 0 : i32
    %c0_i32_0 = arith.constant 0 : i32
    %c0_i32_1 = arith.constant 0 : i32
    return %c0_i32, %c0_i32_0 : i32, i32
  }
  func.func @transform_5(%arg0: i32) -> (i32, i32) {
    %c0_i32 = arith.constant 0 : i32
    %c0_i32_0 = arith.constant 0 : i32
    return %arg0, %c0_i32 : i32, i32
  }
}

</mosaic_0001>

<llo_original>
// kernel: tpu_custom_call.1
$region0: #{tpu_custom_call.1}
  #allocation0 [shape = 'u32[]', space=smem, size = 0x4, offset = 0x4, fixed_abs, tag = 'smem constant byte address 0x4 - core index']
  #allocation1 [shape = 'u32[144,128]{1,0:T(1,128)}', space=vmem, size = 0x12000, scoped, tag = 'internal scratch']
  %s0 = inlined_call_operand.hbm [shape: f32[16,128], index: 0, kind: input, shape index: {}]
  %s1 = inlined_call_operand.hbm [shape: bf16[128,512], index: 1, kind: input, shape index: {}]
  %s2 = inlined_call_operand.hbm [shape: f32[1,512], index: 2, kind: input, shape index: {}]
  %s3 = inlined_call_operand.hbm [shape: bf16[512,128], index: 3, kind: input, shape index: {}]
  %s4 = inlined_call_operand.vmem [shape: f32[1,128], index: 4, kind: input, shape index: {}]
  %s5 = inlined_call_operand.hbm [shape: f32[16,128], index: 5, kind: output, shape index: {}]
  %s6 = sld [smem:[#allocation0]]
  $region69: #{tpu_custom_call.1} parent=0
    _
  %s8 = ssub.s32 1, %s6
  %s9 = scalar_select 0, %s8, %s6
  $region1: #{tpu_custom_call.1} parent=0
    #allocation2 [shape = 'u8[8192]{0}', space=vmem, size = 0x2000, scoped, tag = 'input window, operand 0']
    #allocation3 [shape = 's32[2]{0}', space=sflag, size = 0x8, scoped, tag = 'scoped memory for tpu_custom_call.1']
    #allocation4 [shape = 's32[2]{0}', space=sflag, size = 0x8, scoped, tag = 'scoped memory for tpu_custom_call.1']
    #allocation5 [shape = 'u8[131072]{0}', space=vmem, size = 0x20000, scoped, tag = 'input window, operand 1, single buffered']
    #allocation6 [shape = 's32[1]{0}', space=sflag, size = 0x4, scoped, tag = 'scoped memory for tpu_custom_call.1']
    #allocation7 [shape = 'u8[2048]{0}', space=vmem, size = 0x800, scoped, tag = 'input window, operand 2, single buffered']
    #allocation8 [shape = 'u8[131072]{0}', space=vmem, size = 0x20000, scoped, tag = 'input window, operand 3, single buffered']
    #allocation9 [shape = 's32[1]{0}', space=sflag, size = 0x4, scoped, tag = 'scoped memory for tpu_custom_call.1']
    #allocation10 [shape = 'u8[8192]{0}', space=vmem, size = 0x2000, scoped, tag = 'output window, operand 0']
    %10 = vsyncpa [#allocation3], 0
    %s11 = scalar_lea.sflag [#allocation3], 1
    %12 = vsyncpa %s11, 0
    %13 = vsyncpa [#allocation6], 0
    %14 = vsyncpa [#allocation9], 0
    %15 = vsyncpa [#allocation4], 0
    %s16 = scalar_lea.sflag [#allocation4], 1
    %17 = vsyncpa %s16, 0
    loop: start=0, step=1, limit=4
    $region2: #{tpu_custom_call.1} parent=1 // loop_pre_header
      _
    $region3: #{tpu_custom_call.1} parent=1 // loop_header
      %s19 = sphi 0, %s23
      %p20 = scmp.ge.s32.totalorder %s19, 4
      %s29 = sphi 0, %s31
      %s32 = sphi 0, %s29
      %s33 = sphi 0, %s32
      %s49 = sphi 0, %s33
      %s53 = sphi 0, %s53
      %s55 = sphi 0, %s53
      %s56 = sphi 0, %s55
      %s70 = sphi 0, %s56
      %s74 = sphi 0, %s74
      %s76 = sphi 0, %s74
      %s77 = sphi 0, %s76
      %s91 = sphi 0, %s77
      %s95 = sphi 0, %s95
      %s97 = sphi 0, %s95
      %s98 = sphi 0, %s97
      %s112 = sphi 0, %s98
      %s116 = sphi 0, %s116
      %s118 = sphi 0, %s116
      %s119 = sphi 0, %s118
      %s133 = sphi 0, %s119
      %s139 = sphi 0, %s141
      %s142 = sphi 0, %s139
      %s143 = sphi 0, %s142
      %s159 = sphi 0, %s143
    $region4: #{tpu_custom_call.1} parent=1 // loop_header_branch
      %22 = sbr.rel (%p20) target = $region8
    $region5: #{tpu_custom_call.1} parent=1 // loop_body
      %s24 = ssub.s32 %s19, 1
      %s25 = ssub.s32 %s19, 2
      %s26 = sadd.s32 %s19, 1
      %s27 = ssub.s32 %s19, %s26
      %p28 = scmp.eq.s32.totalorder %s27, 0
      %s30 = sadd.s32 %s29, 1
      %s31 = scalar_select %p28, %s29, %s30
      %p34 = pneg %p28
      %p35 = scmp.eq.s32.totalorder %s19, 1
      %p36 = por %p34, %p35
      %p37 = scmp.ne.s32.totalorder %s29, %s32
      %p38 = scmp.eq.s32.totalorder %s19, 0
      %p39 = por %p37, %p38
      %p40 = scmp.ne.s32.totalorder %s29, %s32
      %p41 = scmp.eq.s32.totalorder %s24, 1
      %p42 = por %p40, %p41
      %p43 = scmp.ne.s32.totalorder %s32, %s33
      %p44 = scmp.eq.s32.totalorder %s24, 0
      %p45 = por %p43, %p44
      %p46 = scmp.ne.s32.totalorder %s32, %s33
      %p47 = scmp.eq.s32.totalorder %s25, 1
      %p48 = por %p46, %p47
      %p50 = scmp.ne.s32.totalorder %s33, %s49
      %p51 = scmp.eq.s32.totalorder %s25, 0
      %p52 = por %p50, %p51
      %s54 = sadd.s32 %s53, 1
      %p57 = scmp.eq.s32.totalorder %s19, 1
      %p58 = scmp.ne.s32.totalorder %s53, %s55
      %p59 = scmp.eq.s32.totalorder %s19, 0
      %p60 = por %p58, %p59
      %p61 = scmp.ne.s32.totalorder %s53, %s55
      %p62 = scmp.eq.s32.totalorder %s24, 1
      %p63 = por %p61, %p62
      %p64 = scmp.ne.s32.totalorder %s55, %s56
      %p65 = scmp.eq.s32.totalorder %s24, 0
      %p66 = por %p64, %p65
      %p67 = scmp.ne.s32.totalorder %s55, %s56
      %p68 = scmp.eq.s32.totalorder %s25, 1
      %p69 = por %p67, %p68
      %p71 = scmp.ne.s32.totalorder %s56, %s70
      %p72 = scmp.eq.s32.totalorder %s25, 0
      %p73 = por %p71, %p72
      %s75 = sadd.s32 %s74, 1
      %p78 = scmp.eq.s32.totalorder %s19, 1
      %p79 = scmp.ne.s32.totalorder %s74, %s76
      %p80 = scmp.eq.s32.totalorder %s19, 0
      %p81 = por %p79, %p80
      %p82 = scmp.ne.s32.totalorder %s74, %s76
      %p83 = scmp.eq.s32.totalorder %s24, 1
      %p84 = por %p82, %p83
      %p85 = scmp.ne.s32.totalorder %s76, %s77
      %p86 = scmp.eq.s32.totalorder %s24, 0
      %p87 = por %p85, %p86
      %p88 = scmp.ne.s32.totalorder %s76, %s77
      %p89 = scmp.eq.s32.totalorder %s25, 1
      %p90 = por %p88, %p89
      %p92 = scmp.ne.s32.totalorder %s77, %s91
      %p93 = scmp.eq.s32.totalorder %s25, 0
      %p94 = por %p92, %p93
      %s96 = sadd.s32 %s95, 1
      %p99 = scmp.eq.s32.totalorder %s19, 1
      %p100 = scmp.ne.s32.totalorder %s95, %s97
      %p101 = scmp.eq.s32.totalorder %s19, 0
      %p102 = por %p100, %p101
      %p103 = scmp.ne.s32.totalorder %s95, %s97
      %p104 = scmp.eq.s32.totalorder %s24, 1
      %p105 = por %p103, %p104
      %p106 = scmp.ne.s32.totalorder %s97, %s98
      %p107 = scmp.eq.s32.totalorder %s24, 0
      %p108 = por %p106, %p107
      %p109 = scmp.ne.s32.totalorder %s97, %s98
      %p110 = scmp.eq.s32.totalorder %s25, 1
      %p111 = por %p109, %p110
      %p113 = scmp.ne.s32.totalorder %s98, %s112
      %p114 = scmp.eq.s32.totalorder %s25, 0
      %p115 = por %p113, %p114
      %s117 = sadd.s32 %s116, 1
      %p120 = scmp.eq.s32.totalorder %s19, 1
      %p121 = scmp.ne.s32.totalorder %s116, %s118
      %p122 = scmp.eq.s32.totalorder %s19, 0
      %p123 = por %p121, %p122
      %p124 = scmp.ne.s32.totalorder %s116, %s118
      %p125 = scmp.eq.s32.totalorder %s24, 1
      %p126 = por %p124, %p125
      %p127 = scmp.ne.s32.totalorder %s118, %s119
      %p128 = scmp.eq.s32.totalorder %s24, 0
      %p129 = por %p127, %p128
      %p130 = scmp.ne.s32.totalorder %s118, %s119
      %p131 = scmp.eq.s32.totalorder %s25, 1
      %p132 = por %p130, %p131
      %p134 = scmp.ne.s32.totalorder %s119, %s133
      %p135 = scmp.eq.s32.totalorder %s25, 0
      %p136 = por %p134, %p135
      %s137 = ssub.s32 %s19, %s26
      %p138 = scmp.eq.s32.totalorder %s137, 0
      %s140 = sadd.s32 %s139, 1
      %s141 = scalar_select %p138, %s139, %s140
      %p144 = pneg %p138
      %p145 = scmp.eq.s32.totalorder %s19, 1
      %p146 = por %p144, %p145
      %p147 = scmp.ne.s32.totalorder %s139, %s142
      %p148 = scmp.eq.s32.totalorder %s19, 0
      %p149 = por %p147, %p148
      %p150 = scmp.ne.s32.totalorder %s139, %s142
      %p151 = scmp.eq.s32.totalorder %s24, 1
      %p152 = por %p150, %p151
      %p153 = scmp.ne.s32.totalorder %s142, %s143
      %p154 = scmp.eq.s32.totalorder %s24, 0
      %p155 = por %p153, %p154
      %p156 = scmp.ne.s32.totalorder %s142, %s143
      %p157 = scmp.eq.s32.totalorder %s25, 1
      %p158 = por %p156, %p157
      %p160 = scmp.ne.s32.totalorder %s143, %s159
      %p161 = scmp.eq.s32.totalorder %s25, 0
      %p162 = por %p160, %p161
      %p163 = scmp.le.s32.totalorder 1, %s19
      %p164 = scmp.lt.s32.totalorder %s19, 3
      %p165 = pnand %p163, %p164
      %p166 = pneg %p165
      // Predicated region
      $region9: #{tpu_custom_call.1} parent=5 // pred_check
        _
      $region10: #{tpu_custom_call.1} parent=5 // pred_check_branch
        %168 = sbr.rel (%p165) target = $region12
      $region11: #{tpu_custom_call.1} parent=5 // pred_region
        %s169 = ssub.s32 %s19, 1
        // Predicated region
        $region13: #{tpu_custom_call.1} parent=11 // pred_check
          %p170 = pneg %p66
        $region14: #{tpu_custom_call.1} parent=11 // pred_check_branch
          %172 = sbr.rel (%p170) target = $region16
        $region15: #{tpu_custom_call.1} parent=11 // pred_region
          %s174 = ssub.s32 4096, 4096
          %175 = vsyncadd [#allocation6], %s174
          %s176 = sshll.u32 [#allocation5], 4
          %s177 = int_to_ptr.vmem [resolvable:$true] %s176
          %182 = dma.hbm_to_vmem [thread:$0]  %s1, 4096, %s177, [#allocation6], 256, 256, 16
        $region16: #{tpu_custom_call.1} parent=11 // pred_fallthru
          _
        // Predicated region
        $region17: #{tpu_custom_call.1} parent=11 // pred_check
          %p183 = pneg %p87
        $region18: #{tpu_custom_call.1} parent=11 // pred_check_branch
          %185 = sbr.rel (%p183) target = $region20
        $region19: #{tpu_custom_call.1} parent=11 // pred_region
          %s187 = ssub.s32 64, 64
          %188 = vsyncadd [#allocation6], %s187
          %s190 = sshll.u32 [#allocation7], 4
          %s191 = int_to_ptr.vmem [resolvable:$true] %s190
          %193 = dma.hbm_to_vmem [thread:$0]  %s2, 64, %s191, [#allocation6]
        $region20: #{tpu_custom_call.1} parent=11 // pred_fallthru
          _
        // Predicated region
        $region21: #{tpu_custom_call.1} parent=11 // pred_check
          %p194 = pneg %p108
        $region22: #{tpu_custom_call.1} parent=11 // pred_check_branch
          %196 = sbr.rel (%p194) target = $region24
        $region23: #{tpu_custom_call.1} parent=11 // pred_region
          %s198 = ssub.s32 4096, 4096
          %199 = vsyncadd [#allocation9], %s198
          %s200 = sshll.u32 [#allocation8], 4
          %s201 = int_to_ptr.vmem [resolvable:$true] %s200
          %206 = dma.hbm_to_vmem [thread:$0]  %s3, 4096, %s201, [#allocation9], 64, 64, 4
        $region24: #{tpu_custom_call.1} parent=11 // pred_fallthru
          _
        // Predicated region
        $region25: #{tpu_custom_call.1} parent=11 // pred_check
          %p207 = pneg %p129
        $region26: #{tpu_custom_call.1} parent=11 // pred_check_branch
          %209 = sbr.rel (%p207) target = $region28
        $region27: #{tpu_custom_call.1} parent=11 // pred_region
          _
        $region28: #{tpu_custom_call.1} parent=11 // pred_fallthru
          _
      $region12: #{tpu_custom_call.1} parent=5 // pred_fallthru
        _
      %p210 = scmp.lt.s32.totalorder %s19, 2
      // Predicated region
      $region29: #{tpu_custom_call.1} parent=5 // pred_check
        %p211 = pneg %p210
      $region30: #{tpu_custom_call.1} parent=5 // pred_check_branch
        %213 = sbr.rel (%p211) target = $region32
      $region31: #{tpu_custom_call.1} parent=5 // pred_region
        // Predicated region
        $region33: #{tpu_custom_call.1} parent=31 // pred_check
          %p214 = pneg %p39
        $region34: #{tpu_custom_call.1} parent=31 // pred_check_branch
          %216 = sbr.rel (%p214) target = $region36
        $region35: #{tpu_custom_call.1} parent=31 // pred_region
          %s217 = sand.u32 %s29, 1
          %s218 = scalar_lea.sflag [#allocation3], %s217
          %s219 = sand.u32 %s29, 1
          %s220 = smul.addr %s219, 8
          %s221 = scalar_lea.vmem [#allocation2], %s220
          %s223 = ssub.s32 128, 128
          %224 = vsyncadd %s218, %s223
          %s225 = smul.addr %s19, 128
          %s226 = scalar_lea.hbm %s0, %s225
          %s228 = sshll.u32 %s221, 4
          %s229 = int_to_ptr.vmem [resolvable:$true] %s228
          %231 = dma.hbm_to_vmem [thread:$0]  %s226, 128, %s229, %s218
        $region36: #{tpu_custom_call.1} parent=31 // pred_fallthru
          _
      $region32: #{tpu_custom_call.1} parent=5 // pred_fallthru
        _
      %p232 = scmp.le.s32.totalorder 1, %s19
      %p233 = scmp.lt.s32.totalorder %s19, 3
      %p234 = pnand %p232, %p233
      %p235 = pneg %p234
      // Predicated region
      $region37: #{tpu_custom_call.1} parent=5 // pred_check
        _
      $region38: #{tpu_custom_call.1} parent=5 // pred_check_branch
        %237 = sbr.rel (%p234) target = $region40
      $region39: #{tpu_custom_call.1} parent=5 // pred_region
        %s238 = ssub.s32 %s19, 1
        %s239 = sand.u32 %s32, 1
        %s240 = scalar_lea.sflag [#allocation3], %s239
        %s241 = sand.u32 %s32, 1
        %s242 = smul.addr %s241, 8
        %s243 = scalar_lea.vmem [#allocation2], %s242
        // Predicated region
        $region41: #{tpu_custom_call.1} parent=39 // pred_check
          %p244 = pneg %p45
        $region42: #{tpu_custom_call.1} parent=39 // pred_check_branch
          %246 = sbr.rel (%p244) target = $region44
        $region43: #{tpu_custom_call.1} parent=39 // pred_region
          %247 = dma.done %s240, 128
        $region44: #{tpu_custom_call.1} parent=39 // pred_fallthru
          _
        // Predicated region
        $region45: #{tpu_custom_call.1} parent=39 // pred_check
          %p248 = pneg %p66
        $region46: #{tpu_custom_call.1} parent=39 // pred_check_branch
          %250 = sbr.rel (%p248) target = $region48
        $region47: #{tpu_custom_call.1} parent=39 // pred_region
          %251 = dma.done [#allocation6], 4096
        $region48: #{tpu_custom_call.1} parent=39 // pred_fallthru
          _
        // Predicated region
        $region49: #{tpu_custom_call.1} parent=39 // pred_check
          %p252 = pneg %p87
        $region50: #{tpu_custom_call.1} parent=39 // pred_check_branch
          %254 = sbr.rel (%p252) target = $region52
        $region51: #{tpu_custom_call.1} parent=39 // pred_region
          %255 = dma.done [#allocation6], 64
        $region52: #{tpu_custom_call.1} parent=39 // pred_fallthru
          _
        // Predicated region
        $region53: #{tpu_custom_call.1} parent=39 // pred_check
          %p256 = pneg %p108
        $region54: #{tpu_custom_call.1} parent=39 // pred_check_branch
          %258 = sbr.rel (%p256) target = $region56
        $region55: #{tpu_custom_call.1} parent=39 // pred_region
          %259 = dma.done [#allocation9], 4096
        $region56: #{tpu_custom_call.1} parent=39 // pred_fallthru
          _
        %s260 = sand.u32 %s32, 1
        %s261 = scalar_lea.sflag [#allocation3], %s260
        %s262 = sand.u32 %s32, 1
        %s263 = smul.addr %s262, 8
        %s264 = scalar_lea.vmem [#allocation2], %s263
        %p265 = pneg %p45
        %p266 = pneg %p42
        %p267 = pneg %p66
        %p268 = pneg %p63
        %p269 = pneg %p87
        %p270 = pneg %p84
        %p271 = pneg %p108
        %p272 = pneg %p105
        %p273 = pneg %p129
        %p274 = pneg %p126
        %p275 = pneg %p155
        %p276 = pneg %p152
        %s277 = sand.u32 %s142, 1
        %s278 = scalar_lea.sflag [#allocation4], %s277
        %s279 = sand.u32 %s142, 1
        %s280 = smul.addr %s279, 8
        %s281 = scalar_lea.vmem [#allocation10], %s280
        %v283 = vld [vmem:[%s243] sm:$0xff]
        %v284 = vpack.c.bf16 %v283, %v283
        %v285 = vld [vmem:[#allocation5] sm:$0xff]
        %v286 = vld [vmem:[#allocation5 + $0x8] sm:$0xff]
        %v287 = vld [vmem:[#allocation5 + $0x10] sm:$0xff]
        %v288 = vld [vmem:[#allocation5 + $0x18] sm:$0xff]
        %v289 = vld [vmem:[#allocation5 + $0x20] sm:$0xff]
        %v290 = vld [vmem:[#allocation5 + $0x28] sm:$0xff]
        %v291 = vld [vmem:[#allocation5 + $0x30] sm:$0xff]
        %v292 = vld [vmem:[#allocation5 + $0x38] sm:$0xff]
        %v293 = vld [vmem:[#allocation5 + $0x40] sm:$0xff]
        %v294 = vld [vmem:[#allocation5 + $0x48] sm:$0xff]
        %v295 = vld [vmem:[#allocation5 + $0x50] sm:$0xff]
        %v296 = vld [vmem:[#allocation5 + $0x58] sm:$0xff]
        %v297 = vld [vmem:[#allocation5 + $0x60] sm:$0xff]
        %v298 = vld [vmem:[#allocation5 + $0x68] sm:$0xff]
        %v299 = vld [vmem:[#allocation5 + $0x70] sm:$0xff]
        %v300 = vld [vmem:[#allocation5 + $0x78] sm:$0xff]
        %v301 = vld [vmem:[#allocation5 + $0x80] sm:$0xff]
        %v302 = vld [vmem:[#allocation5 + $0x88] sm:$0xff]
        %v303 = vld [vmem:[#allocation5 + $0x90] sm:$0xff]
        %v304 = vld [vmem:[#allocation5 + $0x98] sm:$0xff]
        %v305 = vld [vmem:[#allocation5 + $0xa0] sm:$0xff]
        %v306 = vld [vmem:[#allocation5 + $0xa8] sm:$0xff]
        %v307 = vld [vmem:[#allocation5 + $0xb0] sm:$0xff]
        %v308 = vld [vmem:[#allocation5 + $0xb8] sm:$0xff]
        %v309 = vld [vmem:[#allocation5 + $0xc0] sm:$0xff]
        %v310 = vld [vmem:[#allocation5 + $0xc8] sm:$0xff]
        %v311 = vld [vmem:[#allocation5 + $0xd0] sm:$0xff]
        %v312 = vld [vmem:[#allocation5 + $0xd8] sm:$0xff]
        %v313 = vld [vmem:[#allocation5 + $0xe0] sm:$0xff]
        %v314 = vld [vmem:[#allocation5 + $0xe8] sm:$0xff]
        %v315 = vld [vmem:[#allocation5 + $0xf0] sm:$0xff]
        %v316 = vld [vmem:[#allocation5 + $0xf8] sm:$0xff]
        %v317 = vld [vmem:[#allocation7] sm:$0xf]
        %v319 = vlaneseq
        %v320 = vshrl.u32 %v319, 7
        %v321 = vsub.s32 0, %v320
        %v322 = vrot.slane %v317, %v321
        %v323 = vlaneseq
        %v324 = vshrl.u32 %v323, 7
        %v325 = vsub.s32 1, %v324
        %v326 = vrot.slane %v317, %v325
        %v327 = vlaneseq
        %v328 = vshrl.u32 %v327, 7
        %v329 = vsub.s32 2, %v328
        %v330 = vrot.slane %v317, %v329
        %v331 = vlaneseq
        %v332 = vshrl.u32 %v331, 7
        %v333 = vsub.s32 3, %v332
        %v334 = vrot.slane %v317, %v333
        %v371 = vunpack.c.l.b16 %v285
        %v372 = vunpack.c.h.b16 %v285
        %v373 = vunpack.c.l.b16 %v286
        %v374 = vunpack.c.h.b16 %v286
        %v375 = vunpack.c.l.b16 %v287
        %v376 = vunpack.c.h.b16 %v287
        %v377 = vunpack.c.l.b16 %v288
        %v378 = vunpack.c.h.b16 %v288
        %v379 = vunpack.c.l.b16 %v289
        %v380 = vunpack.c.h.b16 %v289
        %v381 = vunpack.c.l.b16 %v290
        %v382 = vunpack.c.h.b16 %v290
        %v383 = vunpack.c.l.b16 %v291
        %v384 = vunpack.c.h.b16 %v291
        %v385 = vunpack.c.l.b16 %v292
        %v386 = vunpack.c.h.b16 %v292
        %v387 = vunpack.c.l.b16 %v293
        %v388 = vunpack.c.h.b16 %v293
        %v389 = vunpack.c.l.b16 %v294
        %v390 = vunpack.c.h.b16 %v294
        %v391 = vunpack.c.l.b16 %v295
        %v392 = vunpack.c.h.b16 %v295
        %v393 = vunpack.c.l.b16 %v296
        %v394 = vunpack.c.h.b16 %v296
        %v395 = vunpack.c.l.b16 %v297
        %v396 = vunpack.c.h.b16 %v297
        %v397 = vunpack.c.l.b16 %v298
        %v398 = vunpack.c.h.b16 %v298
        %v399 = vunpack.c.l.b16 %v299
        %v400 = vunpack.c.h.b16 %v299
        %v401 = vunpack.c.l.b16 %v300
        %v402 = vunpack.c.h.b16 %v300
        %v403 = vunpack.c.l.b16 %v301
        %v404 = vunpack.c.h.b16 %v301
        %v405 = vunpack.c.l.b16 %v302
        %v406 = vunpack.c.h.b16 %v302
        %v407 = vunpack.c.l.b16 %v303
        %v408 = vunpack.c.h.b16 %v303
        %v409 = vunpack.c.l.b16 %v304
        %v410 = vunpack.c.h.b16 %v304
        %v411 = vunpack.c.l.b16 %v305
        %v412 = vunpack.c.h.b16 %v305
        %v413 = vunpack.c.l.b16 %v306
        %v414 = vunpack.c.h.b16 %v306
        %v415 = vunpack.c.l.b16 %v307
        %v416 = vunpack.c.h.b16 %v307
        %v417 = vunpack.c.l.b16 %v308
        %v418 = vunpack.c.h.b16 %v308
        %v419 = vunpack.c.l.b16 %v309
        %v420 = vunpack.c.h.b16 %v309
        %v421 = vunpack.c.l.b16 %v310
        %v422 = vunpack.c.h.b16 %v310
        %v423 = vunpack.c.l.b16 %v311
        %v424 = vunpack.c.h.b16 %v311
        %v425 = vunpack.c.l.b16 %v312
        %v426 = vunpack.c.h.b16 %v312
        %v427 = vunpack.c.l.b16 %v313
        %v428 = vunpack.c.h.b16 %v313
        %v429 = vunpack.c.l.b16 %v314
        %v430 = vunpack.c.h.b16 %v314
        %v431 = vunpack.c.l.b16 %v315
        %v432 = vunpack.c.h.b16 %v315
        %v433 = vunpack.c.l.b16 %v316
        %v434 = vunpack.c.h.b16 %v316
        %v435 = vpack.c.b16 %v375, %v371
        %v436 = vpack.c.b16 %v376, %v372
        %v437 = vpack.c.b16 %v377, %v373
        %v438 = vpack.c.b16 %v378, %v374
        %v439 = vpack.c.b16 %v383, %v379
        %v440 = vpack.c.b16 %v384, %v380
        %v441 = vpack.c.b16 %v385, %v381
        %v442 = vpack.c.b16 %v386, %v382
        %v443 = vpack.c.b16 %v391, %v387
        %v444 = vpack.c.b16 %v392, %v388
        %v445 = vpack.c.b16 %v393, %v389
        %v446 = vpack.c.b16 %v394, %v390
        %v447 = vpack.c.b16 %v399, %v395
        %v448 = vpack.c.b16 %v400, %v396
        %v449 = vpack.c.b16 %v401, %v397
        %v450 = vpack.c.b16 %v402, %v398
        %v451 = vpack.c.b16 %v407, %v403
        %v452 = vpack.c.b16 %v408, %v404
        %v453 = vpack.c.b16 %v409, %v405
        %v454 = vpack.c.b16 %v410, %v406
        %v455 = vpack.c.b16 %v415, %v411
        %v456 = vpack.c.b16 %v416, %v412
        %v457 = vpack.c.b16 %v417, %v413
        %v458 = vpack.c.b16 %v418, %v414
        %v459 = vpack.c.b16 %v423, %v419
        %v460 = vpack.c.b16 %v424, %v420
        %v461 = vpack.c.b16 %v425, %v421
        %v462 = vpack.c.b16 %v426, %v422
        %v463 = vpack.c.b16 %v431, %v427
        %v464 = vpack.c.b16 %v432, %v428
        %v465 = vpack.c.b16 %v433, %v429
        %v466 = vpack.c.b16 %v434, %v430
        %499 = vmatprep.subr.bf16.mxu0 %v464
        %500 = vmatpush1.bf16.msra.mxu0 %v463
        %501 = vmatprep.subr.bf16.mxu0 %v460
        %502 = vmatpush1.bf16.msra.mxu0 %v459
        %503 = vmatprep.subr.bf16.mxu0 %v456
        %504 = vmatpush1.bf16.msra.mxu0 %v455
        %505 = vmatprep.subr.bf16.mxu0 %v452
        %506 = vmatpush1.bf16.msra.mxu0 %v451
        %507 = vmatprep.subr.bf16.mxu0 %v448
        %508 = vmatpush1.bf16.msra.mxu0 %v447
        %509 = vmatprep.subr.bf16.mxu0 %v444
        %510 = vmatpush1.bf16.msra.mxu0 %v443
        %511 = vmatprep.subr.bf16.mxu0 %v440
        %512 = vmatpush1.bf16.msra.mxu0 %v439
        %513 = vmatprep.subr.bf16.mxu0 %v436
        %514 = vmatpush1.bf16.msra.mxu0 %v435
        %515 = vmatprep.subr.bf16.mxu0 0
        %516 = vmatpush2.bf16.msra.mxu0 0
        %517 = vmatprep.subr.bf16.mxu0 0
        %518 = vmatpush2.bf16.msra.mxu0 0
        %519 = vmatprep.subr.bf16.mxu0 0
        %520 = vmatpush2.bf16.msra.mxu0 0
        %521 = vmatprep.subr.bf16.mxu0 0
        %522 = vmatpush2.bf16.msra.mxu0 0
        %523 = vmatprep.subr.bf16.mxu0 0
        %524 = vmatpush2.bf16.msra.mxu0 0
        %525 = vmatprep.subr.bf16.mxu0 0
        %526 = vmatpush2.bf16.msra.mxu0 0
        %527 = vmatprep.subr.bf16.mxu0 0
        %528 = vmatpush2.bf16.msra.mxu0 0
        %529 = vmatprep.subr.bf16.mxu0 0
        %530 = vmatpush2.bf16.msra.mxu0 0
        %531 = vmatprep.mubr.bf16.mxu0 0
        %532 = vmatmul.mubr.bf16.gmra.mxu0 %v284
        %v533 = vpop.f32.mrf.mxu0
        %v534 = vadd.f32 %v322, %v533
        %v535 = vpop.f32.mrf.mxu0
        %v536 = vadd.f32 %v326, %v535
        %v537 = vpop.f32.mrf.mxu0
        %v538 = vpop.f32.mrf.mxu0
        %539 = vdwg.mxu0
        %540 = vmatprep.subr.bf16.mxu0 %v466
        %541 = vmatpush1.bf16.msra.mxu0 %v465
        %542 = vmatprep.subr.bf16.mxu0 %v462
        %543 = vmatpush1.bf16.msra.mxu0 %v461
        %544 = vmatprep.subr.bf16.mxu0 %v458
        %545 = vmatpush1.bf16.msra.mxu0 %v457
        %546 = vmatprep.subr.bf16.mxu0 %v454
        %547 = vmatpush1.bf16.msra.mxu0 %v453
        %548 = vmatprep.subr.bf16.mxu0 %v450
        %549 = vmatpush1.bf16.msra.mxu0 %v449
        %550 = vmatprep.subr.bf16.mxu0 %v446
        %551 = vmatpush1.bf16.msra.mxu0 %v445
        %552 = vmatprep.subr.bf16.mxu0 %v442
        %553 = vmatpush1.bf16.msra.mxu0 %v441
        %554 = vmatprep.subr.bf16.mxu0 %v438
        %555 = vmatpush1.bf16.msra.mxu0 %v437
        %556 = vmatprep.subr.bf16.mxu0 0
        %557 = vmatpush2.bf16.msra.mxu0 0
        %558 = vmatprep.subr.bf16.mxu0 0
        %559 = vmatpush2.bf16.msra.mxu0 0
        %560 = vmatprep.subr.bf16.mxu0 0
        %561 = vmatpush2.bf16.msra.mxu0 0
        %562 = vmatprep.subr.bf16.mxu0 0
        %563 = vmatpush2.bf16.msra.mxu0 0
        %564 = vmatprep.subr.bf16.mxu0 0
        %565 = vmatpush2.bf16.msra.mxu0 0
        %566 = vmatprep.subr.bf16.mxu0 0
        %567 = vmatpush2.bf16.msra.mxu0 0
        %568 = vmatprep.subr.bf16.mxu0 0
        %569 = vmatpush2.bf16.msra.mxu0 0
        %570 = vmatprep.subr.bf16.mxu0 0
        %571 = vmatpush2.bf16.msra.mxu0 0
        %572 = vmatprep.mubr.bf16.mxu0 0
        %573 = vmatmul.mubr.bf16.gmra.mxu0 %v284
        %v574 = vpop.f32.mrf.mxu0
        %v575 = vadd.f32 %v330, %v574
        %v576 = vpop.f32.mrf.mxu0
        %v577 = vadd.f32 %v334, %v576
        %v578 = vpop.f32.mrf.mxu0
        %v579 = vpop.f32.mrf.mxu0
        %580 = vdwg.mxu0
        %v581 = vmul.f32 %v534, %v534
        %v582 = vmul.f32 %v536, %v536
        %v583 = vmul.f32 %v575, %v575
        %v584 = vmul.f32 %v577, %v577
        %v585 = vmul.f32 %v581, 0.044715
        %v586 = vmul.f32 %v582, 0.044715
        %v587 = vmul.f32 %v583, 0.044715
        %v588 = vmul.f32 %v584, 0.044715
        %v589 = vadd.f32 %v585, 1.0
        %v590 = vadd.f32 %v586, 1.0
        %v591 = vadd.f32 %v587, 1.0
        %v592 = vadd.f32 %v588, 1.0
        %v593 = vmul.f32 %v534, %v589
        %v594 = vmul.f32 %v536, %v590
        %v595 = vmul.f32 %v575, %v591
        %v596 = vmul.f32 %v577, %v592
        %v597 = vmul.f32 %v534, 0.5
        %v598 = vmul.f32 %v536, 0.5
        %v599 = vmul.f32 %v575, 0.5
        %v600 = vmul.f32 %v577, 0.5
        %v601 = vmul.f32 %v593, 0.7978846
        %v602 = vmul.f32 %v594, 0.7978846
        %v603 = vmul.f32 %v595, 0.7978846
        %v604 = vmul.f32 %v596, 0.7978846
        %v605 = vtanh.pop %v601
        %v606 = vtanh.pop %v602
        %v607 = vtanh.pop %v603
        %v608 = vtanh.pop %v604
        %v609 = vadd.f32 %v605, 1.0
        %v610 = vadd.f32 %v606, 1.0
        %v611 = vadd.f32 %v607, 1.0
        %v612 = vadd.f32 %v608, 1.0
        %v613 = vmul.f32 %v597, %v609
        %v614 = vmul.f32 %v598, %v610
        %v615 = vmul.f32 %v599, %v611
        %v616 = vmul.f32 %v600, %v612
        %v617 = vpack.c.bf16 %v613, %v613
        %v618 = vpack.c.bf16 %v614, %v614
        %v619 = vpack.c.bf16 %v615, %v615
        %v620 = vpack.c.bf16 %v616, %v616
        %v621 = vld [vmem:[#allocation8] sm:$0xf]
        %v622 = vld [vmem:[#allocation8 + $0x4] sm:$0xf]
        %v623 = vld [vmem:[#allocation8 + $0x8] sm:$0xf]
        %v624 = vld [vmem:[#allocation8 + $0xc] sm:$0xf]
        %v625 = vld [vmem:[#allocation8 + $0x10] sm:$0xf]
        %v626 = vld [vmem:[#allocation8 + $0x14] sm:$0xf]
        %v627 = vld [vmem:[#allocation8 + $0x18] sm:$0xf]
        %v628 = vld [vmem:[#allocation8 + $0x1c] sm:$0xf]
        %v629 = vld [vmem:[#allocation8 + $0x20] sm:$0xf]
        %v630 = vld [vmem:[#allocation8 + $0x24] sm:$0xf]
        %v631 = vld [vmem:[#allocation8 + $0x28] sm:$0xf]
        %v632 = vld [vmem:[#allocation8 + $0x2c] sm:$0xf]
        %v633 = vld [vmem:[#allocation8 + $0x30] sm:$0xf]
        %v634 = vld [vmem:[#allocation8 + $0x34] sm:$0xf]
        %v635 = vld [vmem:[#allocation8 + $0x38] sm:$0xf]
        %v636 = vld [vmem:[#allocation8 + $0x3c] sm:$0xf]
        %v637 = vld [vmem:[#allocation8 + $0x40] sm:$0xf]
        %v638 = vld [vmem:[#allocation8 + $0x44] sm:$0xf]
        %v639 = vld [vmem:[#allocation8 + $0x48] sm:$0xf]
        %v640 = vld [vmem:[#allocation8 + $0x4c] sm:$0xf]
        %v641 = vld [vmem:[#allocation8 + $0x50] sm:$0xf]
        %v642 = vld [vmem:[#allocation8 + $0x54] sm:$0xf]
        %v643 = vld [vmem:[#allocation8 + $0x58] sm:$0xf]
        %v644 = vld [vmem:[#allocation8 + $0x5c] sm:$0xf]
        %v645 = vld [vmem:[#allocation8 + $0x60] sm:$0xf]
        %v646 = vld [vmem:[#allocation8 + $0x64] sm:$0xf]
        %v647 = vld [vmem:[#allocation8 + $0x68] sm:$0xf]
        %v648 = vld [vmem:[#allocation8 + $0x6c] sm:$0xf]
        %v649 = vld [vmem:[#allocation8 + $0x70] sm:$0xf]
        %v650 = vld [vmem:[#allocation8 + $0x74] sm:$0xf]
        %v651 = vld [vmem:[#allocation8 + $0x78] sm:$0xf]
        %v652 = vld [vmem:[#allocation8 + $0x7c] sm:$0xf]
        %v653 = vld [vmem:[#allocation8 + $0x80] sm:$0xf]
        %v654 = vld [vmem:[#allocation8 + $0x84] sm:$0xf]
        %v655 = vld [vmem:[#allocation8 + $0x88] sm:$0xf]
        %v656 = vld [vmem:[#allocation8 + $0x8c] sm:$0xf]
        %v657 = vld [vmem:[#allocation8 + $0x90] sm:$0xf]
        %v658 = vld [vmem:[#allocation8 + $0x94] sm:$0xf]
        %v659 = vld [vmem:[#allocation8 + $0x98] sm:$0xf]
        %v660 = vld [vmem:[#allocation8 + $0x9c] sm:$0xf]
        %v661 = vld [vmem:[#allocation8 + $0xa0] sm:$0xf]
        %v662 = vld [vmem:[#allocation8 + $0xa4] sm:$0xf]
        %v663 = vld [vmem:[#allocation8 + $0xa8] sm:$0xf]
        %v664 = vld [vmem:[#allocation8 + $0xac] sm:$0xf]
        %v665 = vld [vmem:[#allocation8 + $0xb0] sm:$0xf]
        %v666 = vld [vmem:[#allocation8 + $0xb4] sm:$0xf]
        %v667 = vld [vmem:[#allocation8 + $0xb8] sm:$0xf]
        %v668 = vld [vmem:[#allocation8 + $0xbc] sm:$0xf]
        %v669 = vld [vmem:[#allocation8 + $0xc0] sm:$0xf]
        %v670 = vld [vmem:[#allocation8 + $0xc4] sm:$0xf]
        %v671 = vld [vmem:[#allocation8 + $0xc8] sm:$0xf]
        %v672 = vld [vmem:[#allocation8 + $0xcc] sm:$0xf]
        %v673 = vld [vmem:[#allocation8 + $0xd0] sm:$0xf]
        %v674 = vld [vmem:[#allocation8 + $0xd4] sm:$0xf]
        %v675 = vld [vmem:[#allocation8 + $0xd8] sm:$0xf]
        %v676 = vld [vmem:[#allocation8 + $0xdc] sm:$0xf]
        %v677 = vld [vmem:[#allocation8 + $0xe0] sm:$0xf]
        %v678 = vld [vmem:[#allocation8 + $0xe4] sm:$0xf]
        %v679 = vld [vmem:[#allocation8 + $0xe8] sm:$0xf]
        %v680 = vld [vmem:[#allocation8 + $0xec] sm:$0xf]
        %v681 = vld [vmem:[#allocation8 + $0xf0] sm:$0xf]
        %v682 = vld [vmem:[#allocation8 + $0xf4] sm:$0xf]
        %v683 = vld [vmem:[#allocation8 + $0xf8] sm:$0xf]
        %v684 = vld [vmem:[#allocation8 + $0xfc] sm:$0xf]
        %v685 = vld [vmem:[%s4] sm:$0x1]
        %v687 = vlaneseq
        %v688 = vshrl.u32 %v687, 7
        %v689 = vsub.s32 0, %v688
        %v690 = vrot.slane %v685, %v689
        %v756 = vunpack.c.l.b16 %v621
        %v757 = vunpack.c.l.b16 %v622
        %v758 = vunpack.c.l.b16 %v623
        %v759 = vunpack.c.l.b16 %v624
        %v760 = vunpack.c.l.b16 %v625
        %v761 = vunpack.c.l.b16 %v626
        %v762 = vunpack.c.l.b16 %v627
        %v763 = vunpack.c.l.b16 %v628
        %v764 = vunpack.c.l.b16 %v629
        %v765 = vunpack.c.l.b16 %v630
        %v766 = vunpack.c.l.b16 %v631
        %v767 = vunpack.c.l.b16 %v632
        %v768 = vunpack.c.l.b16 %v633
        %v769 = vunpack.c.l.b16 %v634
        %v770 = vunpack.c.l.b16 %v635
        %v771 = vunpack.c.l.b16 %v636
        %v772 = vunpack.c.l.b16 %v637
        %v773 = vunpack.c.l.b16 %v638
        %v774 = vunpack.c.l.b16 %v639
        %v775 = vunpack.c.l.b16 %v640
        %v776 = vunpack.c.l.b16 %v641
        %v777 = vunpack.c.l.b16 %v642
        %v778 = vunpack.c.l.b16 %v643
        %v779 = vunpack.c.l.b16 %v644
        %v780 = vunpack.c.l.b16 %v645
        %v781 = vunpack.c.l.b16 %v646
        %v782 = vunpack.c.l.b16 %v647
        %v783 = vunpack.c.l.b16 %v648
        %v784 = vunpack.c.l.b16 %v649
        %v785 = vunpack.c.l.b16 %v650
        %v786 = vunpack.c.l.b16 %v651
        %v787 = vunpack.c.l.b16 %v652
        %v788 = vunpack.c.l.b16 %v653
        %v789 = vunpack.c.l.b16 %v654
        %v790 = vunpack.c.l.b16 %v655
        %v791 = vunpack.c.l.b16 %v656
        %v792 = vunpack.c.l.b16 %v657
        %v793 = vunpack.c.l.b16 %v658
        %v794 = vunpack.c.l.b16 %v659
        %v795 = vunpack.c.l.b16 %v660
        %v796 = vunpack.c.l.b16 %v661
        %v797 = vunpack.c.l.b16 %v662
        %v798 = vunpack.c.l.b16 %v663
        %v799 = vunpack.c.l.b16 %v664
        %v800 = vunpack.c.l.b16 %v665
        %v801 = vunpack.c.l.b16 %v666
        %v802 = vunpack.c.l.b16 %v667
        %v803 = vunpack.c.l.b16 %v668
        %v804 = vunpack.c.l.b16 %v669
        %v805 = vunpack.c.l.b16 %v670
        %v806 = vunpack.c.l.b16 %v671
        %v807 = vunpack.c.l.b16 %v672
        %v808 = vunpack.c.l.b16 %v673
        %v809 = vunpack.c.l.b16 %v674
        %v810 = vunpack.c.l.b16 %v675
        %v811 = vunpack.c.l.b16 %v676
        %v812 = vunpack.c.l.b16 %v677
        %v813 = vunpack.c.l.b16 %v678
        %v814 = vunpack.c.l.b16 %v679
        %v815 = vunpack.c.l.b16 %v680
        %v816 = vunpack.c.l.b16 %v681
        %v817 = vunpack.c.l.b16 %v682
        %v818 = vunpack.c.l.b16 %v683
        %v819 = vunpack.c.l.b16 %v684
        %v820 = vpack.c.b16 %v757, %v756
        %v821 = vpack.c.b16 %v759, %v758
        %v822 = vpack.c.b16 %v761, %v760
        %v823 = vpack.c.b16 %v763, %v762
        %v824 = vpack.c.b16 %v765, %v764
        %v825 = vpack.c.b16 %v767, %v766
        %v826 = vpack.c.b16 %v769, %v768
        %v827 = vpack.c.b16 %v771, %v770
        %v828 = vpack.c.b16 %v773, %v772
        %v829 = vpack.c.b16 %v775, %v774
        %v830 = vpack.c.b16 %v777, %v776
        %v831 = vpack.c.b16 %v779, %v778
        %v832 = vpack.c.b16 %v781, %v780
        %v833 = vpack.c.b16 %v783, %v782
        %v834 = vpack.c.b16 %v785, %v784
        %v835 = vpack.c.b16 %v787, %v786
        %v836 = vpack.c.b16 %v789, %v788
        %v837 = vpack.c.b16 %v791, %v790
        %v838 = vpack.c.b16 %v793, %v792
        %v839 = vpack.c.b16 %v795, %v794
        %v840 = vpack.c.b16 %v797, %v796
        %v841 = vpack.c.b16 %v799, %v798
        %v842 = vpack.c.b16 %v801, %v800
        %v843 = vpack.c.b16 %v803, %v802
        %v844 = vpack.c.b16 %v805, %v804
        %v845 = vpack.c.b16 %v807, %v806
        %v846 = vpack.c.b16 %v809, %v808
        %v847 = vpack.c.b16 %v811, %v810
        %v848 = vpack.c.b16 %v813, %v812
        %v849 = vpack.c.b16 %v815, %v814
        %v850 = vpack.c.b16 %v817, %v816
        %v851 = vpack.c.b16 %v819, %v818
        %884 = vmatprep.subr.bf16.mxu0 0
        %885 = vmatpush1.bf16.msra.mxu0 %v827
        %886 = vmatprep.subr.bf16.mxu0 0
        %887 = vmatpush1.bf16.msra.mxu0 %v826
        %888 = vmatprep.subr.bf16.mxu0 0
        %889 = vmatpush1.bf16.msra.mxu0 %v825
        %890 = vmatprep.subr.bf16.mxu0 0
        %891 = vmatpush1.bf16.msra.mxu0 %v824
        %892 = vmatprep.subr.bf16.mxu0 0
        %893 = vmatpush1.bf16.msra.mxu0 %v823
        %894 = vmatprep.subr.bf16.mxu0 0
        %895 = vmatpush1.bf16.msra.mxu0 %v822
        %896 = vmatprep.subr.bf16.mxu0 0
        %897 = vmatpush1.bf16.msra.mxu0 %v821
        %898 = vmatprep.subr.bf16.mxu0 0
        %899 = vmatpush1.bf16.msra.mxu0 %v820
        %900 = vmatprep.subr.bf16.mxu0 0
        %901 = vmatpush2.bf16.msra.mxu0 %v835
        %902 = vmatprep.subr.bf16.mxu0 0
        %903 = vmatpush2.bf16.msra.mxu0 %v834
        %904 = vmatprep.subr.bf16.mxu0 0
        %905 = vmatpush2.bf16.msra.mxu0 %v833
        %906 = vmatprep.subr.bf16.mxu0 0
        %907 = vmatpush2.bf16.msra.mxu0 %v832
        %908 = vmatprep.subr.bf16.mxu0 0
        %909 = vmatpush2.bf16.msra.mxu0 %v831
        %910 = vmatprep.subr.bf16.mxu0 0
        %911 = vmatpush2.bf16.msra.mxu0 %v830
        %912 = vmatprep.subr.bf16.mxu0 0
        %913 = vmatpush2.bf16.msra.mxu0 %v829
        %914 = vmatprep.subr.bf16.mxu0 0
        %915 = vmatpush2.bf16.msra.mxu0 %v828
        %916 = vmatprep.mubr.bf16.mxu0 %v618
        %917 = vmatmul.mubr.bf16.gmra.mxu0 %v617
        %v918 = vpop.f32.mrf.mxu0
        %v919 = vadd.f32 %v690, %v918
        %v920 = vpop.f32.mrf.mxu0
        %v921 = vpop.f32.mrf.mxu0
        %v922 = vpop.f32.mrf.mxu0
        %923 = vdwg.mxu0
        %924 = vmatprep.subr.bf16.mxu0 0
        %925 = vmatpush1.bf16.msra.mxu0 %v843
        %926 = vmatprep.subr.bf16.mxu0 0
        %927 = vmatpush1.bf16.msra.mxu0 %v842
        %928 = vmatprep.subr.bf16.mxu0 0
        %929 = vmatpush1.bf16.msra.mxu0 %v841
        %930 = vmatprep.subr.bf16.mxu0 0
        %931 = vmatpush1.bf16.msra.mxu0 %v840
        %932 = vmatprep.subr.bf16.mxu0 0
        %933 = vmatpush1.bf16.msra.mxu0 %v839
        %934 = vmatprep.subr.bf16.mxu0 0
        %935 = vmatpush1.bf16.msra.mxu0 %v838
        %936 = vmatprep.subr.bf16.mxu0 0
        %937 = vmatpush1.bf16.msra.mxu0 %v837
        %938 = vmatprep.subr.bf16.mxu0 0
        %939 = vmatpush1.bf16.msra.mxu0 %v836
        %940 = vmatprep.subr.bf16.mxu0 0
        %941 = vmatpush2.bf16.msra.mxu0 %v851
        %942 = vmatprep.subr.bf16.mxu0 0
        %943 = vmatpush2.bf16.msra.mxu0 %v850
        %944 = vmatprep.subr.bf16.mxu0 0
        %945 = vmatpush2.bf16.msra.mxu0 %v849
        %946 = vmatprep.subr.bf16.mxu0 0
        %947 = vmatpush2.bf16.msra.mxu0 %v848
        %948 = vmatprep.subr.bf16.mxu0 0
        %949 = vmatpush2.bf16.msra.mxu0 %v847
        %950 = vmatprep.subr.bf16.mxu0 0
        %951 = vmatpush2.bf16.msra.mxu0 %v846
        %952 = vmatprep.subr.bf16.mxu0 0
        %953 = vmatpush2.bf16.msra.mxu0 %v845
        %954 = vmatprep.subr.bf16.mxu0 0
        %955 = vmatpush2.bf16.msra.mxu0 %v844
        %956 = vmatprep.mubr.bf16.mxu0 %v620
        %957 = vmatmul.mubr.bf16.gmra.mxu0 %v619
        %v958 = vpop.f32.mrf.mxu0
        %v959 = vadd.f32 %v919, %v958
        %v960 = vpop.f32.mrf.mxu0
        %v961 = vpop.f32.mrf.mxu0
        %v962 = vpop.f32.mrf.mxu0
        %963 = vdwg.mxu0
        %964 = vst [vmem:[%s281] sm:$0xff] %v959
        %s965 = sand.u32 %s142, 1
        %s966 = scalar_lea.sflag [#allocation4], %s965
        %s967 = sand.u32 %s142, 1
        %s968 = smul.addr %s967, 8
        %s969 = scalar_lea.vmem [#allocation10], %s968
        // Predicated region
        $region57: #{tpu_custom_call.1} parent=39 // pred_check
          %p970 = pneg %p152
        $region58: #{tpu_custom_call.1} parent=39 // pred_check_branch
          %972 = sbr.rel (%p970) target = $region60
        $region59: #{tpu_custom_call.1} parent=39 // pred_region
          %s974 = ssub.s32 128, 128
          %975 = vsyncadd %s966, %s974
          %s976 = smul.addr %s24, 128
          %s977 = scalar_lea.hbm %s5, %s976
          %s979 = sshll.u32 %s969, 4
          %s980 = int_to_ptr.vmem [resolvable:$true] %s979
          %982 = dma.vmem_to_hbm [thread:$0]  %s980, 128, %s977, %s966
        $region60: #{tpu_custom_call.1} parent=39 // pred_fallthru
          _
      $region40: #{tpu_custom_call.1} parent=5 // pred_fallthru
        _
      %p983 = scmp.le.s32.totalorder 2, %s19
      // Predicated region
      $region61: #{tpu_custom_call.1} parent=5 // pred_check
        %p984 = pneg %p983
      $region62: #{tpu_custom_call.1} parent=5 // pred_check_branch
        %986 = sbr.rel (%p984) target = $region64
      $region63: #{tpu_custom_call.1} parent=5 // pred_region
        %s987 = ssub.s32 %s19, 2
        // Predicated region
        $region65: #{tpu_custom_call.1} parent=63 // pred_check
          %p988 = pneg %p158
        $region66: #{tpu_custom_call.1} parent=63 // pred_check_branch
          %990 = sbr.rel (%p988) target = $region68
        $region67: #{tpu_custom_call.1} parent=63 // pred_region
          %s991 = sand.u32 %s143, 1
          %s992 = scalar_lea.sflag [#allocation4], %s991
          %s993 = sand.u32 %s143, 1
          %s994 = smul.addr %s993, 8
          %s995 = scalar_lea.vmem [#allocation10], %s994
          %996 = dma.done %s992, 128
        $region68: #{tpu_custom_call.1} parent=63 // pred_fallthru
          _
      $region64: #{tpu_custom_call.1} parent=5 // pred_fallthru
        _
    $region6: #{tpu_custom_call.1} parent=1 // loop_footer
      %s23 = sadd.s32 1, %s19
    $region7: #{tpu_custom_call.1} parent=1 // loop_footer_branch
      %18 = sbr.rel target = $region3
    $region8: #{tpu_custom_call.1} parent=1 // loop_exit
      _
    %997 = vsyncpa [#allocation3], 1
    %s998 = scalar_lea.sflag [#allocation3], 1
    %999 = vsyncpa %s998, 1
    %1000 = vsyncpa [#allocation6], 1
    %1001 = vsyncpa [#allocation9], 1
    %1002 = vsyncpa [#allocation4], 1
    %s1003 = scalar_lea.sflag [#allocation4], 1
    %1004 = vsyncpa %s1003, 1

</llo_original>
